<compile_context>
chip_gen: v7x
topology: tpu7x:2x2x1
jax: 0.10.0
libtpu: 0.0.40
codegen_flags: <defaults>
</compile_context>

<pallas_src>
import functools

import jax
import jax.numpy as jnp
from jax.experimental import pallas as pl
from jax.experimental.pallas import tpu as pltpu

CONTEXT_SIZE = 3
EMBEDDING_DIM = 10
HIDDEN = 128
VOCAB_SIZE = 160          # len(set(test_sentence)) in the original script

V_PAD = 256               # vocab padded to a multiple of 128 lanes
K_FUSED = CONTEXT_SIZE * V_PAD   # 768: fused gather+linear1 contraction width
NEG_INF = -1e30           # padded-logit fill so log_softmax ignores pad lanes


def cbow_kernel(idx_ref, w1f_ref, b1_ref, w2_ref, b2_ref, out_ref):
    bm = out_ref.shape[0]

    # One concatenated one-hot over the fused 768-wide K: lane j is hot iff
    # j == idx[:, c] + c*256 for some context slot c.  Single bf16 cast pass.
    iota = jax.lax.broadcasted_iota(jnp.int32, (bm, K_FUSED), 1)
    hit = iota == idx_ref[:, 0:1]
    for c in range(1, CONTEXT_SIZE):
        hit = hit | (iota == idx_ref[:, c:c + 1] + c * V_PAD)
    onehot = hit.astype(jnp.bfloat16)                              # (BM, 768)

    # Fused embedding-gather + linear1: one clean K=768, N=128 MXU matmul.
    h = jnp.dot(onehot, w1f_ref[...],
                preferred_element_type=jnp.float32)                # (BM, 128) f32
    h = jnp.maximum(h + b1_ref[...], 0.0)                          # ReLU, f32

    logits = jnp.dot(h.astype(jnp.bfloat16), w2_ref[...],
                     preferred_element_type=jnp.float32) + b2_ref[...]  # (BM, 256)

    # Numerically stable log_softmax; padded lanes hold -1e30 -> exp == 0.
    m = jnp.max(logits, axis=-1, keepdims=True)
    shifted = logits - m
    lse = jnp.log(jnp.sum(jnp.exp(shifted), axis=-1, keepdims=True))
    out_ref[...] = shifted - lse


def prepare_cbow_params(emb_table, w1, b1, w2, b2):
    """One-time weight prep (call ONCE, outside the per-forward path).

    Folds the embedding table into linear1 and pads to lane-friendly shapes:
      w1f: (C*V_PAD, 128) bf16  -- row (c*V_PAD + v) == bf16(emb[v] @ W1_slot_c)
      b1 : (1, 128) f32
      w2 : (128, V_PAD) bf16    -- pad columns are 0
      b2 : (1, V_PAD) f32       -- pad lanes are -1e30
    """
    v, e = emb_table.shape
    emb_p = jnp.zeros((V_PAD, e), jnp.float32).at[:v, :].set(emb_table)
    w1_3d = w1.reshape(CONTEXT_SIZE, e, HIDDEN)
    fused = jnp.einsum('ve,ceh->cvh', emb_p, w1_3d,
                       precision=jax.lax.Precision.HIGHEST)        # (C, V_PAD, H) f32
    w1f = fused.reshape(K_FUSED, HIDDEN).astype(jnp.bfloat16)
    b1_p = b1.reshape(1, HIDDEN).astype(jnp.float32)
    w2_p = (jnp.zeros((HIDDEN, V_PAD), jnp.float32)
            .at[:, :v].set(w2).astype(jnp.bfloat16))
    b2_p = (jnp.full((1, V_PAD), NEG_INF, jnp.float32)
            .at[0, :v].set(b2.reshape(-1).astype(jnp.float32)))
    return w1f, b1_p, w2_p, b2_p


@functools.partial(jax.jit, static_argnames=("block_b",))
def cbow_forward(w1f, b1, w2, b2, inputs, block_b=None):
    """Batched CBOW forward.

    w1f/b1/w2/b2: outputs of prepare_cbow_params (prepared once).
    inputs:       (B, C) int32 context-word indices.
    returns:      (B, V) f32 log-probs; row b == module.forward(inputs[b]).
    """
    batch = inputs.shape[0]
    if block_b is None:
        # >= 2 parallel blocks so both v7x TensorCores get work; rows per block
        # a multiple of 8, capped at 512 (MXU rows saturated, VMEM tiny there).
        half = pl.cdiv(batch, 2)
        block_b = min(512, max(8, ((half + 7) // 8) * 8))
    n_blocks = pl.cdiv(batch, block_b)
    b_pad = n_blocks * block_b

    idx = inputs.astype(jnp.int32)
    if b_pad != batch:
        idx = jnp.pad(idx, ((0, b_pad - batch), (0, 0)))

    # Grid-invariant weights: single-buffered (no pointless double-buffering).
    weight = lambda shape: pl.BlockSpec(
        shape, lambda i: (0,) * len(shape), pipeline_mode=pl.Buffered(1))

    out = pl.pallas_call(
        cbow_kernel,
        out_shape=jax.ShapeDtypeStruct((b_pad, V_PAD), jnp.float32),
        grid=(n_blocks,),
        in_specs=[
            pl.BlockSpec((block_b, CONTEXT_SIZE), lambda i: (i, 0)),  # ids
            weight((K_FUSED, HIDDEN)),                                # fused emb@W1
            weight((1, HIDDEN)),                                      # b1
            weight((HIDDEN, V_PAD)),                                  # W2
            weight((1, V_PAD)),                                       # b2
        ],
        out_specs=pl.BlockSpec((block_b, V_PAD), lambda i: (i, 0)),
        compiler_params=pltpu.CompilerParams(
            dimension_semantics=("parallel",)),
    )(idx, w1f, b1, w2, b2)

    # TODO(synk): at very large B, return the padded (b_pad, V_PAD) block and
    # slice lazily downstream to avoid this extra XLA copy (low priority).
    return out[:batch, :VOCAB_SIZE]


if __name__ == "__main__":
    key = jax.random.PRNGKey(0)
    k_emb, k_w1, k_b1, k_w2, k_b2, k_in = jax.random.split(key, 6)

    B = 32  # small demo batch; auto block_b=16 -> 2 parallel grid blocks
    D_IN = CONTEXT_SIZE * EMBEDDING_DIM

    # Deterministic synthetic parameters (shapes from CBOWModeler.__init__).
    emb_table = jax.random.normal(k_emb, (VOCAB_SIZE, EMBEDDING_DIM), jnp.float32)
    w1 = jax.random.normal(k_w1, (D_IN, HIDDEN), jnp.float32) * 0.1        # linear1.weight.T
    b1 = jax.random.normal(k_b1, (HIDDEN,), jnp.float32) * 0.1             # linear1.bias
    w2 = jax.random.normal(k_w2, (HIDDEN, VOCAB_SIZE), jnp.float32) * 0.1  # linear2.weight.T
    b2 = jax.random.normal(k_b2, (VOCAB_SIZE,), jnp.float32) * 0.1         # linear2.bias
    inputs = jax.random.randint(k_in, (B, CONTEXT_SIZE), 0, VOCAB_SIZE, jnp.int32)

    # One-time weight prep (hoisted out of the per-forward path).
    params = prepare_cbow_params(emb_table, w1, b1, w2, b2)
    log_probs = jax.block_until_ready(cbow_forward(*params, inputs))

    # Pure-JAX reference mirroring the kernel's bf16 casting points:
    #   per-slot (emb @ W1_slot) in f32 -> bf16 (== folded table rows),
    #   sum over slots + b1, ReLU, bf16 matmul vs bf16 W2 with f32 accum.
    f32b = lambda a: a.astype(jnp.bfloat16).astype(jnp.float32)
    x = emb_table[inputs]                                      # (B, C, E) f32
    hc = jnp.einsum('bce,ceh->bch', x, w1.reshape(CONTEXT_SIZE, EMBEDDING_DIM, HIDDEN),
                    precision=jax.lax.Precision.HIGHEST)
    h_ref = jnp.maximum(f32b(hc).sum(axis=1) + b1[None, :], 0.0)
    logits_ref = jnp.dot(f32b(h_ref), f32b(w2),
                         precision=jax.lax.Precision.HIGHEST) + b2[None, :]
    ref = jax.nn.log_softmax(logits_ref, axis=-1)

    assert log_probs.shape == (B, VOCAB_SIZE)
    assert jnp.allclose(log_probs, ref, atol=2e-2, rtol=2e-3), (
        float(jnp.max(jnp.abs(log_probs - ref))))
    print("KERNEL_OK")
</pallas_src>

<mosaic_0001>
module attributes {stable_mosaic.version = 11 : i64} {
  func.func @cbow_kernel(%arg0: i32, %arg1: memref<16x3xi32, #tpu.memory_space<vmem>>, %arg2: memref<768x128xbf16, #tpu.memory_space<vmem>>, %arg3: memref<1x128xf32, #tpu.memory_space<vmem>>, %arg4: memref<128x256xbf16, #tpu.memory_space<vmem>>, %arg5: memref<1x256xf32, #tpu.memory_space<vmem>>, %arg6: memref<16x256xf32, #tpu.memory_space<vmem>>) attributes {dimension_semantics = [#tpu.dimension_semantics<parallel>], iteration_bounds = array<i64: 2>, scalar_prefetch = 0 : i64, scratch_operands = 0 : i64, tpu.core_type = #tpu.core_type<tc>, window_params = [{transform_indices = @transform_0, window_bounds = array<i64: 16, 3>}, {pipeline_mode = #tpu.pipeline_mode<synchronous>, transform_indices = @transform_1, window_bounds = array<i64: 768, 128>}, {pipeline_mode = #tpu.pipeline_mode<synchronous>, transform_indices = @transform_2, window_bounds = array<i64: 1, 128>}, {pipeline_mode = #tpu.pipeline_mode<synchronous>, transform_indices = @transform_3, window_bounds = array<i64: 128, 256>}, {pipeline_mode = #tpu.pipeline_mode<synchronous>, transform_indices = @transform_4, window_bounds = array<i64: 1, 256>}, {transform_indices = @transform_5, window_bounds = array<i64: 16, 256>}]} {
    %0 = tpu.iota {dimensions = array<i32: 1>} : vector<16x768xi32>
    %c0 = arith.constant 0 : index
    %c0_0 = arith.constant 0 : index
    %1 = vector.load %arg1[%c0, %c0_0] : memref<16x3xi32, #tpu.memory_space<vmem>>, vector<16x1xi32>
    %2 = vector.broadcast %1 : vector<16x1xi32> to vector<16x768xi32>
    %3 = arith.cmpi eq, %0, %2 : vector<16x768xi32>
    %c0_1 = arith.constant 0 : index
    %c1 = arith.constant 1 : index
    %4 = vector.load %arg1[%c0_1, %c1] : memref<16x3xi32, #tpu.memory_space<vmem>>, vector<16x1xi32>
    %c256_i32 = arith.constant 256 : i32
    %5 = vector.broadcast %c256_i32 : i32 to vector<16x1xi32>
    %6 = arith.addi %4, %5 : vector<16x1xi32>
    %7 = vector.broadcast %6 : vector<16x1xi32> to vector<16x768xi32>
    %8 = arith.cmpi eq, %0, %7 : vector<16x768xi32>
    %9 = arith.ori %3, %8 : vector<16x768xi1>
    %c0_2 = arith.constant 0 : index
    %c2 = arith.constant 2 : index
    %10 = vector.load %arg1[%c0_2, %c2] : memref<16x3xi32, #tpu.memory_space<vmem>>, vector<16x1xi32>
    %c512_i32 = arith.constant 512 : i32
    %11 = vector.broadcast %c512_i32 : i32 to vector<16x1xi32>
    %12 = arith.addi %10, %11 : vector<16x1xi32>
    %13 = vector.broadcast %12 : vector<16x1xi32> to vector<16x768xi32>
    %14 = arith.cmpi eq, %0, %13 : vector<16x768xi32>
    %15 = arith.ori %9, %14 : vector<16x768xi1>
    %16 = arith.extui %15 : vector<16x768xi1> to vector<16x768xi32>
    %17 = arith.sitofp %16 : vector<16x768xi32> to vector<16x768xf32>
    %18 = arith.truncf %17 : vector<16x768xf32> to vector<16x768xbf16>
    %c0_3 = arith.constant 0 : index
    %c0_4 = arith.constant 0 : index
    %19 = vector.load %arg2[%c0_3, %c0_4] : memref<768x128xbf16, #tpu.memory_space<vmem>>, vector<768x128xbf16>
    %cst = arith.constant dense<0.000000e+00> : vector<16x128xf32>
    %20 = tpu.matmul %18, %19, %cst {dimension_numbers = #tpu.dot_dimension_numbers<[1], [0], [0], [1], [0, 0, 1, 1], [], []>} : vector<16x768xbf16>, vector<768x128xbf16>, vector<16x128xf32> -> vector<16x128xf32>
    %c0_5 = arith.constant 0 : index
    %c0_6 = arith.constant 0 : index
    %21 = vector.load %arg3[%c0_5, %c0_6] : memref<1x128xf32, #tpu.memory_space<vmem>>, vector<1x128xf32>
    %22 = vector.broadcast %21 : vector<1x128xf32> to vector<16x128xf32>
    %23 = arith.addf %20, %22 : vector<16x128xf32>
    %cst_7 = arith.constant 0.000000e+00 : f32
    %24 = vector.broadcast %cst_7 : f32 to vector<16x128xf32>
    %25 = arith.maximumf %23, %24 : vector<16x128xf32>
    %26 = arith.truncf %25 : vector<16x128xf32> to vector<16x128xbf16>
    %c0_8 = arith.constant 0 : index
    %c0_9 = arith.constant 0 : index
    %27 = vector.load %arg4[%c0_8, %c0_9] : memref<128x256xbf16, #tpu.memory_space<vmem>>, vector<128x256xbf16>
    %cst_10 = arith.constant dense<0.000000e+00> : vector<16x256xf32>
    %28 = tpu.matmul %26, %27, %cst_10 {dimension_numbers = #tpu.dot_dimension_numbers<[1], [0], [0], [1], [0, 0, 1, 1], [], []>} : vector<16x128xbf16>, vector<128x256xbf16>, vector<16x256xf32> -> vector<16x256xf32>
    %c0_11 = arith.constant 0 : index
    %c0_12 = arith.constant 0 : index
    %29 = vector.load %arg5[%c0_11, %c0_12] : memref<1x256xf32, #tpu.memory_space<vmem>>, vector<1x256xf32>
    %30 = vector.broadcast %29 : vector<1x256xf32> to vector<16x256xf32>
    %31 = arith.addf %28, %30 : vector<16x256xf32>
    %cst_13 = arith.constant dense<0xFF800000> : vector<16xf32>
    %32 = vector.multi_reduction <maximumf>, %31, %cst_13 [1] : vector<16x256xf32> to vector<16xf32>
    %33 = vector.shape_cast %32 : vector<16xf32> to vector<16x1xf32>
    %34 = vector.broadcast %33 : vector<16x1xf32> to vector<16x256xf32>
    %35 = arith.subf %31, %34 : vector<16x256xf32>
    %36 = math.exp %35 : vector<16x256xf32>
    %cst_14 = arith.constant dense<0.000000e+00> : vector<16xf32>
    %37 = vector.multi_reduction <add>, %36, %cst_14 [1] : vector<16x256xf32> to vector<16xf32>
    %38 = vector.shape_cast %37 : vector<16xf32> to vector<16x1xf32>
    %39 = math.log %38 : vector<16x1xf32>
    %40 = vector.broadcast %39 : vector<16x1xf32> to vector<16x256xf32>
    %41 = arith.subf %35, %40 : vector<16x256xf32>
    %c0_15 = arith.constant 0 : index
    %c0_16 = arith.constant 0 : index
    %42 = vector.load %arg6[%c0_15, %c0_16] : memref<16x256xf32, #tpu.memory_space<vmem>>, vector<16x256xf32>
    tpu.vector_store %arg6[%c0_15, %c0_16], %41 {strides = array<i32>} : memref<16x256xf32, #tpu.memory_space<vmem>>, vector<16x256xf32>,
    return
  }
  func.func @transform_0(%arg0: i32) -> (i32, i32) {
    %c0_i32 = arith.constant 0 : i32
    %c0_i32_0 = arith.constant 0 : i32
    return %arg0, %c0_i32 : i32, i32
  }
  func.func @transform_1(%arg0: i32) -> (i32, i32) {
    %c0_i32 = arith.constant 0 : i32
    %c0_i32_0 = arith.constant 0 : i32
    %c0_i32_1 = arith.constant 0 : i32
    return %c0_i32, %c0_i32_0 : i32, i32
  }
  func.func @transform_2(%arg0: i32) -> (i32, i32) {
    %c0_i32 = arith.constant 0 : i32
    %c0_i32_0 = arith.constant 0 : i32
    %c0_i32_1 = arith.constant 0 : i32
    return %c0_i32, %c0_i32_0 : i32, i32
  }
  func.func @transform_3(%arg0: i32) -> (i32, i32) {
    %c0_i32 = arith.constant 0 : i32
    %c0_i32_0 = arith.constant 0 : i32
    %c0_i32_1 = arith.constant 0 : i32
    return %c0_i32, %c0_i32_0 : i32, i32
  }
  func.func @transform_4(%arg0: i32) -> (i32, i32) {
    %c0_i32 = arith.constant 0 : i32
    %c0_i32_0 = arith.constant 0 : i32
    %c0_i32_1 = arith.constant 0 : i32
    return %c0_i32, %c0_i32_0 : i32, i32
  }
  func.func @transform_5(%arg0: i32) -> (i32, i32) {
    %c0_i32 = arith.constant 0 : i32
    %c0_i32_0 = arith.constant 0 : i32
    return %arg0, %c0_i32 : i32, i32
  }
}

</mosaic_0001>

<llo_original>
// kernel: cbow_forward.1
$region0: #{cbow_forward.1}
  #allocation0 [shape = 'u32[]', space=smem, size = 0x4, offset = 0x4, fixed_abs, tag = 'smem constant byte address 0x4 - core index']
  #allocation1 [shape = 'u32[144,128]{1,0:T(1,128)}', space=vmem, size = 0x12000, scoped, tag = 'internal scratch']
  %s0 = inlined_call_operand.vmem [shape: s32[32,3], index: 0, kind: input, shape index: {}]
  %s1 = inlined_call_operand.hbm [shape: bf16[768,128], index: 1, kind: input, shape index: {}]
  %s2 = inlined_call_operand.vmem [shape: f32[1,128], index: 2, kind: input, shape index: {}]
  %s3 = inlined_call_operand.hbm [shape: bf16[128,256], index: 3, kind: input, shape index: {}]
  %s4 = inlined_call_operand.vmem [shape: f32[1,256], index: 4, kind: input, shape index: {}]
  %s5 = inlined_call_operand.hbm [shape: f32[32,256], index: 5, kind: output, shape index: {}]
  %s6 = sld [smem:[#allocation0]]
  $region61: #{cbow_forward.1} parent=0
    _
  %s8 = ssub.s32 1, %s6
  %s9 = scalar_select 0, %s8, %s6
  $region1: #{cbow_forward.1} parent=0
    #allocation2 [shape = 'u8[196608]{0}', space=vmem, size = 0x30000, scoped, tag = 'input window, operand 1, single buffered']
    #allocation3 [shape = 's32[2]{0}', space=sflag, size = 0x8, scoped, tag = 'scoped memory for cbow_forward.1']
    #allocation4 [shape = 's32[2]{0}', space=sflag, size = 0x8, scoped, tag = 'scoped memory for cbow_forward.1']
    #allocation5 [shape = 'u8[65536]{0}', space=vmem, size = 0x10000, scoped, tag = 'input window, operand 3, single buffered']
    #allocation6 [shape = 's32[1]{0}', space=sflag, size = 0x4, scoped, tag = 'scoped memory for cbow_forward.1']
    #allocation7 [shape = 'u8[32768]{0}', space=vmem, size = 0x8000, scoped, tag = 'output window, operand 0']
    %10 = vsyncpa [#allocation3], 0
    %11 = vsyncpa [#allocation6], 0
    %12 = vsyncpa [#allocation4], 0
    %s13 = scalar_lea.sflag [#allocation4], 1
    %14 = vsyncpa %s13, 0
    loop: start=0, step=1, limit=4
    $region2: #{cbow_forward.1} parent=1 // loop_pre_header
      _
    $region3: #{cbow_forward.1} parent=1 // loop_header
      %s16 = sphi 0, %s20
      %p17 = scmp.ge.s32.totalorder %s16, 4
      %s26 = sphi 0, %s28
      %s29 = sphi 0, %s26
      %s30 = sphi 0, %s29
      %s46 = sphi 0, %s30
      %s50 = sphi 0, %s50
      %s52 = sphi 0, %s50
      %s53 = sphi 0, %s52
      %s67 = sphi 0, %s53
      %s71 = sphi 0, %s71
      %s73 = sphi 0, %s71
      %s74 = sphi 0, %s73
      %s88 = sphi 0, %s74
      %s92 = sphi 0, %s92
      %s94 = sphi 0, %s92
      %s95 = sphi 0, %s94
      %s109 = sphi 0, %s95
      %s113 = sphi 0, %s113
      %s115 = sphi 0, %s113
      %s116 = sphi 0, %s115
      %s130 = sphi 0, %s116
      %s136 = sphi 0, %s138
      %s139 = sphi 0, %s136
      %s140 = sphi 0, %s139
      %s156 = sphi 0, %s140
    $region4: #{cbow_forward.1} parent=1 // loop_header_branch
      %19 = sbr.rel (%p17) target = $region8
    $region5: #{cbow_forward.1} parent=1 // loop_body
      %s21 = ssub.s32 %s16, 1
      %s22 = ssub.s32 %s16, 2
      %s23 = sadd.s32 %s16, 1
      %s24 = ssub.s32 %s16, %s23
      %p25 = scmp.eq.s32.totalorder %s24, 0
      %s27 = sadd.s32 %s26, 1
      %s28 = scalar_select %p25, %s26, %s27
      %p31 = pneg %p25
      %p32 = scmp.eq.s32.totalorder %s16, 1
      %p33 = por %p31, %p32
      %p34 = scmp.ne.s32.totalorder %s26, %s29
      %p35 = scmp.eq.s32.totalorder %s16, 0
      %p36 = por %p34, %p35
      %p37 = scmp.ne.s32.totalorder %s26, %s29
      %p38 = scmp.eq.s32.totalorder %s21, 1
      %p39 = por %p37, %p38
      %p40 = scmp.ne.s32.totalorder %s29, %s30
      %p41 = scmp.eq.s32.totalorder %s21, 0
      %p42 = por %p40, %p41
      %p43 = scmp.ne.s32.totalorder %s29, %s30
      %p44 = scmp.eq.s32.totalorder %s22, 1
      %p45 = por %p43, %p44
      %p47 = scmp.ne.s32.totalorder %s30, %s46
      %p48 = scmp.eq.s32.totalorder %s22, 0
      %p49 = por %p47, %p48
      %s51 = sadd.s32 %s50, 1
      %p54 = scmp.eq.s32.totalorder %s16, 1
      %p55 = scmp.ne.s32.totalorder %s50, %s52
      %p56 = scmp.eq.s32.totalorder %s16, 0
      %p57 = por %p55, %p56
      %p58 = scmp.ne.s32.totalorder %s50, %s52
      %p59 = scmp.eq.s32.totalorder %s21, 1
      %p60 = por %p58, %p59
      %p61 = scmp.ne.s32.totalorder %s52, %s53
      %p62 = scmp.eq.s32.totalorder %s21, 0
      %p63 = por %p61, %p62
      %p64 = scmp.ne.s32.totalorder %s52, %s53
      %p65 = scmp.eq.s32.totalorder %s22, 1
      %p66 = por %p64, %p65
      %p68 = scmp.ne.s32.totalorder %s53, %s67
      %p69 = scmp.eq.s32.totalorder %s22, 0
      %p70 = por %p68, %p69
      %s72 = sadd.s32 %s71, 1
      %p75 = scmp.eq.s32.totalorder %s16, 1
      %p76 = scmp.ne.s32.totalorder %s71, %s73
      %p77 = scmp.eq.s32.totalorder %s16, 0
      %p78 = por %p76, %p77
      %p79 = scmp.ne.s32.totalorder %s71, %s73
      %p80 = scmp.eq.s32.totalorder %s21, 1
      %p81 = por %p79, %p80
      %p82 = scmp.ne.s32.totalorder %s73, %s74
      %p83 = scmp.eq.s32.totalorder %s21, 0
      %p84 = por %p82, %p83
      %p85 = scmp.ne.s32.totalorder %s73, %s74
      %p86 = scmp.eq.s32.totalorder %s22, 1
      %p87 = por %p85, %p86
      %p89 = scmp.ne.s32.totalorder %s74, %s88
      %p90 = scmp.eq.s32.totalorder %s22, 0
      %p91 = por %p89, %p90
      %s93 = sadd.s32 %s92, 1
      %p96 = scmp.eq.s32.totalorder %s16, 1
      %p97 = scmp.ne.s32.totalorder %s92, %s94
      %p98 = scmp.eq.s32.totalorder %s16, 0
      %p99 = por %p97, %p98
      %p100 = scmp.ne.s32.totalorder %s92, %s94
      %p101 = scmp.eq.s32.totalorder %s21, 1
      %p102 = por %p100, %p101
      %p103 = scmp.ne.s32.totalorder %s94, %s95
      %p104 = scmp.eq.s32.totalorder %s21, 0
      %p105 = por %p103, %p104
      %p106 = scmp.ne.s32.totalorder %s94, %s95
      %p107 = scmp.eq.s32.totalorder %s22, 1
      %p108 = por %p106, %p107
      %p110 = scmp.ne.s32.totalorder %s95, %s109
      %p111 = scmp.eq.s32.totalorder %s22, 0
      %p112 = por %p110, %p111
      %s114 = sadd.s32 %s113, 1
      %p117 = scmp.eq.s32.totalorder %s16, 1
      %p118 = scmp.ne.s32.totalorder %s113, %s115
      %p119 = scmp.eq.s32.totalorder %s16, 0
      %p120 = por %p118, %p119
      %p121 = scmp.ne.s32.totalorder %s113, %s115
      %p122 = scmp.eq.s32.totalorder %s21, 1
      %p123 = por %p121, %p122
      %p124 = scmp.ne.s32.totalorder %s115, %s116
      %p125 = scmp.eq.s32.totalorder %s21, 0
      %p126 = por %p124, %p125
      %p127 = scmp.ne.s32.totalorder %s115, %s116
      %p128 = scmp.eq.s32.totalorder %s22, 1
      %p129 = por %p127, %p128
      %p131 = scmp.ne.s32.totalorder %s116, %s130
      %p132 = scmp.eq.s32.totalorder %s22, 0
      %p133 = por %p131, %p132
      %s134 = ssub.s32 %s16, %s23
      %p135 = scmp.eq.s32.totalorder %s134, 0
      %s137 = sadd.s32 %s136, 1
      %s138 = scalar_select %p135, %s136, %s137
      %p141 = pneg %p135
      %p142 = scmp.eq.s32.totalorder %s16, 1
      %p143 = por %p141, %p142
      %p144 = scmp.ne.s32.totalorder %s136, %s139
      %p145 = scmp.eq.s32.totalorder %s16, 0
      %p146 = por %p144, %p145
      %p147 = scmp.ne.s32.totalorder %s136, %s139
      %p148 = scmp.eq.s32.totalorder %s21, 1
      %p149 = por %p147, %p148
      %p150 = scmp.ne.s32.totalorder %s139, %s140
      %p151 = scmp.eq.s32.totalorder %s21, 0
      %p152 = por %p150, %p151
      %p153 = scmp.ne.s32.totalorder %s139, %s140
      %p154 = scmp.eq.s32.totalorder %s22, 1
      %p155 = por %p153, %p154
      %p157 = scmp.ne.s32.totalorder %s140, %s156
      %p158 = scmp.eq.s32.totalorder %s22, 0
      %p159 = por %p157, %p158
      %p160 = scmp.le.s32.totalorder 1, %s16
      %p161 = scmp.lt.s32.totalorder %s16, 3
      %p162 = pnand %p160, %p161
      %p163 = pneg %p162
      // Predicated region
      $region9: #{cbow_forward.1} parent=5 // pred_check
        _
      $region10: #{cbow_forward.1} parent=5 // pred_check_branch
        %165 = sbr.rel (%p162) target = $region12
      $region11: #{cbow_forward.1} parent=5 // pred_region
        %s166 = ssub.s32 %s16, 1
        // Predicated region
        $region13: #{cbow_forward.1} parent=11 // pred_check
          %p167 = pneg %p63
        $region14: #{cbow_forward.1} parent=11 // pred_check_branch
          %169 = sbr.rel (%p167) target = $region16
        $region15: #{cbow_forward.1} parent=11 // pred_region
          %s171 = ssub.s32 6144, 6144
          %172 = vsyncadd [#allocation3], %s171
          %s173 = sshll.u32 [#allocation2], 4
          %s174 = int_to_ptr.vmem [resolvable:$true] %s173
          %179 = dma.hbm_to_vmem [thread:$0]  %s1, 6144, %s174, [#allocation3], 64, 64, 4
        $region16: #{cbow_forward.1} parent=11 // pred_fallthru
          _
        // Predicated region
        $region17: #{cbow_forward.1} parent=11 // pred_check
          %p180 = pneg %p84
        $region18: #{cbow_forward.1} parent=11 // pred_check_branch
          %182 = sbr.rel (%p180) target = $region20
        $region19: #{cbow_forward.1} parent=11 // pred_region
          _
        $region20: #{cbow_forward.1} parent=11 // pred_fallthru
          _
        // Predicated region
        $region21: #{cbow_forward.1} parent=11 // pred_check
          %p183 = pneg %p105
        $region22: #{cbow_forward.1} parent=11 // pred_check_branch
          %185 = sbr.rel (%p183) target = $region24
        $region23: #{cbow_forward.1} parent=11 // pred_region
          %s187 = ssub.s32 2048, 2048
          %188 = vsyncadd [#allocation6], %s187
          %s189 = sshll.u32 [#allocation5], 4
          %s190 = int_to_ptr.vmem [resolvable:$true] %s189
          %195 = dma.hbm_to_vmem [thread:$0]  %s3, 2048, %s190, [#allocation6], 128, 128, 8
        $region24: #{cbow_forward.1} parent=11 // pred_fallthru
          _
        // Predicated region
        $region25: #{cbow_forward.1} parent=11 // pred_check
          %p196 = pneg %p126
        $region26: #{cbow_forward.1} parent=11 // pred_check_branch
          %198 = sbr.rel (%p196) target = $region28
        $region27: #{cbow_forward.1} parent=11 // pred_region
          _
        $region28: #{cbow_forward.1} parent=11 // pred_fallthru
          _
      $region12: #{cbow_forward.1} parent=5 // pred_fallthru
        _
      %p199 = scmp.lt.s32.totalorder %s16, 2
      // Predicated region
      $region29: #{cbow_forward.1} parent=5 // pred_check
        %p200 = pneg %p199
      $region30: #{cbow_forward.1} parent=5 // pred_check_branch
        %202 = sbr.rel (%p200) target = $region32
      $region31: #{cbow_forward.1} parent=5 // pred_region
        // Predicated region
        $region33: #{cbow_forward.1} parent=31 // pred_check
          %p203 = pneg %p36
        $region34: #{cbow_forward.1} parent=31 // pred_check_branch
          %205 = sbr.rel (%p203) target = $region36
        $region35: #{cbow_forward.1} parent=31 // pred_region
          %s206 = smul.u32 2, %s16
          %p207 = scmp.lt.s32.totalorder %s206, 3
          %s208 = scalar_select %p207, %s206, 3
          %s209 = smul.addr %s208, 8
          %s210 = scalar_lea.vmem %s0, %s209
          %s211 = smul.u32 2, %s16
        $region36: #{cbow_forward.1} parent=31 // pred_fallthru
          _
      $region32: #{cbow_forward.1} parent=5 // pred_fallthru
        _
      %p212 = scmp.le.s32.totalorder 1, %s16
      %p213 = scmp.lt.s32.totalorder %s16, 3
      %p214 = pnand %p212, %p213
      %p215 = pneg %p214
      // Predicated region
      $region37: #{cbow_forward.1} parent=5 // pred_check
        _
      $region38: #{cbow_forward.1} parent=5 // pred_check_branch
        %217 = sbr.rel (%p214) target = $region40
      $region39: #{cbow_forward.1} parent=5 // pred_region
        %s218 = ssub.s32 %s16, 1
        // Predicated region
        $region41: #{cbow_forward.1} parent=39 // pred_check
          %p219 = pneg %p63
        $region42: #{cbow_forward.1} parent=39 // pred_check_branch
          %221 = sbr.rel (%p219) target = $region44
        $region43: #{cbow_forward.1} parent=39 // pred_region
          %222 = dma.done [#allocation3], 6144
        $region44: #{cbow_forward.1} parent=39 // pred_fallthru
          _
        // Predicated region
        $region45: #{cbow_forward.1} parent=39 // pred_check
          %p223 = pneg %p105
        $region46: #{cbow_forward.1} parent=39 // pred_check_branch
          %225 = sbr.rel (%p223) target = $region48
        $region47: #{cbow_forward.1} parent=39 // pred_region
          %226 = dma.done [#allocation6], 2048
        $region48: #{cbow_forward.1} parent=39 // pred_fallthru
          _
        %s227 = smul.u32 2, %s21
        %p228 = scmp.lt.s32.totalorder %s227, 3
        %s229 = scalar_select %p228, %s227, 3
        %s230 = smul.addr %s229, 8
        %s231 = scalar_lea.vmem %s0, %s230
        %p232 = pneg %p42
        %p233 = pneg %p39
        %p234 = pneg %p63
        %p235 = pneg %p60
        %p236 = pneg %p84
        %p237 = pneg %p81
        %p238 = pneg %p105
        %p239 = pneg %p102
        %p240 = pneg %p126
        %p241 = pneg %p123
        %p242 = pneg %p152
        %p243 = pneg %p149
        %s244 = sand.u32 %s139, 1
        %s245 = scalar_lea.sflag [#allocation4], %s244
        %s246 = sand.u32 %s139, 1
        %s247 = smul.addr %s246, 32
        %s248 = scalar_lea.vmem [#allocation7], %s247
        %s249 = smul.u32 2, %s21
        %p250 = scmp.lt.s32.totalorder %s249, 3
        %s251 = scalar_select %p250, %s249, 3
        %s252 = smul.addr %s251, 8
        %s253 = scalar_lea.vmem %s0, %s252
        %s254 = smul.u32 2, %s21
        %s255 = smul.u32 2, %s21
        %v257 = vlaneseq
        %v258 = vand.u32 %v257, 127
        %v259 = vadd.s32 %v258, 128
        %v260 = vadd.s32 %v258, 256
        %v261 = vadd.s32 %v258, 384
        %v262 = vadd.s32 %v258, 512
        %v263 = vadd.s32 %v258, 640
        %v264 = vld [vmem:[%s253] sm:$0xff]
        %v265 = vld [vmem:[%s253 + $0x8] sm:$0xff]
        %266 = vset.pattern.permute.xlu0 0
        %267 = vperm.xlu0 %266, %v264
        %v268 = vpop.permute.xlu0 %267
        %269 = vset.pattern.permute.xlu0 0
        %270 = vperm.xlu0 %269, %v265
        %v271 = vpop.permute.xlu0 %270
        %vm272 = vcmp.eq.s32.totalorder %v258, %v268
        %vm273 = vcmp.eq.s32.totalorder %v259, %v268
        %vm274 = vcmp.eq.s32.totalorder %v260, %v268
        %vm275 = vcmp.eq.s32.totalorder %v261, %v268
        %vm276 = vcmp.eq.s32.totalorder %v262, %v268
        %vm277 = vcmp.eq.s32.totalorder %v263, %v268
        %vm278 = vcmp.eq.s32.totalorder %v258, %v271
        %vm279 = vcmp.eq.s32.totalorder %v259, %v271
        %vm280 = vcmp.eq.s32.totalorder %v260, %v271
        %vm281 = vcmp.eq.s32.totalorder %v261, %v271
        %vm282 = vcmp.eq.s32.totalorder %v262, %v271
        %vm283 = vcmp.eq.s32.totalorder %v263, %v271
        %v284 = vadd.s32 %v264, 256
        %v285 = vadd.s32 %v265, 256
        %286 = vset.pattern.permute.xlu0 1
        %287 = vperm.xlu0 %286, %v284
        %v288 = vpop.permute.xlu0 %287
        %289 = vset.pattern.permute.xlu0 1
        %290 = vperm.xlu0 %289, %v285
        %v291 = vpop.permute.xlu0 %290
        %vm292 = vcmp.eq.s32.totalorder %v258, %v288
        %vm293 = vcmp.eq.s32.totalorder %v259, %v288
        %vm294 = vcmp.eq.s32.totalorder %v260, %v288
        %vm295 = vcmp.eq.s32.totalorder %v261, %v288
        %vm296 = vcmp.eq.s32.totalorder %v262, %v288
        %vm297 = vcmp.eq.s32.totalorder %v263, %v288
        %vm298 = vcmp.eq.s32.totalorder %v258, %v291
        %vm299 = vcmp.eq.s32.totalorder %v259, %v291
        %vm300 = vcmp.eq.s32.totalorder %v260, %v291
        %vm301 = vcmp.eq.s32.totalorder %v261, %v291
        %vm302 = vcmp.eq.s32.totalorder %v262, %v291
        %vm303 = vcmp.eq.s32.totalorder %v263, %v291
        %vm304 = vmor %vm272, %vm292
        %vm305 = vmor %vm273, %vm293
        %vm306 = vmor %vm274, %vm294
        %vm307 = vmor %vm275, %vm295
        %vm308 = vmor %vm276, %vm296
        %vm309 = vmor %vm277, %vm297
        %vm310 = vmor %vm278, %vm298
        %vm311 = vmor %vm279, %vm299
        %vm312 = vmor %vm280, %vm300
        %vm313 = vmor %vm281, %vm301
        %vm314 = vmor %vm282, %vm302
        %vm315 = vmor %vm283, %vm303
        %v316 = vadd.s32 %v264, 512
        %v317 = vadd.s32 %v265, 512
        %318 = vset.pattern.permute.xlu0 2
        %319 = vperm.xlu0 %318, %v316
        %v320 = vpop.permute.xlu0 %319
        %321 = vset.pattern.permute.xlu0 2
        %322 = vperm.xlu0 %321, %v317
        %v323 = vpop.permute.xlu0 %322
        %vm324 = vcmp.eq.s32.totalorder %v258, %v320
        %vm325 = vcmp.eq.s32.totalorder %v259, %v320
        %vm326 = vcmp.eq.s32.totalorder %v260, %v320
        %vm327 = vcmp.eq.s32.totalorder %v261, %v320
        %vm328 = vcmp.eq.s32.totalorder %v262, %v320
        %vm329 = vcmp.eq.s32.totalorder %v263, %v320
        %vm330 = vcmp.eq.s32.totalorder %v258, %v323
        %vm331 = vcmp.eq.s32.totalorder %v259, %v323
        %vm332 = vcmp.eq.s32.totalorder %v260, %v323
        %vm333 = vcmp.eq.s32.totalorder %v261, %v323
        %vm334 = vcmp.eq.s32.totalorder %v262, %v323
        %vm335 = vcmp.eq.s32.totalorder %v263, %v323
        %vm336 = vmor %vm304, %vm324
        %vm337 = vmor %vm305, %vm325
        %vm338 = vmor %vm306, %vm326
        %vm339 = vmor %vm307, %vm327
        %vm340 = vmor %vm308, %vm328
        %vm341 = vmor %vm309, %vm329
        %vm342 = vmor %vm310, %vm330
        %vm343 = vmor %vm311, %vm331
        %vm344 = vmor %vm312, %vm332
        %vm345 = vmor %vm313, %vm333
        %vm346 = vmor %vm314, %vm334
        %vm347 = vmor %vm315, %vm335
        %v348 = vsel %vm336, 1, 0
        %v349 = vsel %vm337, 1, 0
        %v350 = vsel %vm338, 1, 0
        %v351 = vsel %vm339, 1, 0
        %v352 = vsel %vm340, 1, 0
        %v353 = vsel %vm341, 1, 0
        %v354 = vsel %vm342, 1, 0
        %v355 = vsel %vm343, 1, 0
        %v356 = vsel %vm344, 1, 0
        %v357 = vsel %vm345, 1, 0
        %v358 = vsel %vm346, 1, 0
        %v359 = vsel %vm347, 1, 0
        %v360 = vcvt.s32.f32 %v348
        %v361 = vcvt.s32.f32 %v349
        %v362 = vcvt.s32.f32 %v350
        %v363 = vcvt.s32.f32 %v351
        %v364 = vcvt.s32.f32 %v352
        %v365 = vcvt.s32.f32 %v353
        %v366 = vcvt.s32.f32 %v354
        %v367 = vcvt.s32.f32 %v355
        %v368 = vcvt.s32.f32 %v356
        %v369 = vcvt.s32.f32 %v357
        %v370 = vcvt.s32.f32 %v358
        %v371 = vcvt.s32.f32 %v359
        %v372 = vpack.c.bf16 %v366, %v360
        %v373 = vpack.c.bf16 %v367, %v361
        %v374 = vpack.c.bf16 %v368, %v362
        %v375 = vpack.c.bf16 %v369, %v363
        %v376 = vpack.c.bf16 %v370, %v364
        %v377 = vpack.c.bf16 %v371, %v365
        %v378 = vld [vmem:[#allocation2] sm:$0xf]
        %v379 = vld [vmem:[#allocation2 + $0x4] sm:$0xf]
        %v380 = vld [vmem:[#allocation2 + $0x8] sm:$0xf]
        %v381 = vld [vmem:[#allocation2 + $0xc] sm:$0xf]
        %v382 = vld [vmem:[#allocation2 + $0x10] sm:$0xf]
        %v383 = vld [vmem:[#allocation2 + $0x14] sm:$0xf]
        %v384 = vld [vmem:[#allocation2 + $0x18] sm:$0xf]
        %v385 = vld [vmem:[#allocation2 + $0x1c] sm:$0xf]
        %v386 = vld [vmem:[#allocation2 + $0x20] sm:$0xf]
        %v387 = vld [vmem:[#allocation2 + $0x24] sm:$0xf]
        %v388 = vld [vmem:[#allocation2 + $0x28] sm:$0xf]
        %v389 = vld [vmem:[#allocation2 + $0x2c] sm:$0xf]
        %v390 = vld [vmem:[#allocation2 + $0x30] sm:$0xf]
        %v391 = vld [vmem:[#allocation2 + $0x34] sm:$0xf]
        %v392 = vld [vmem:[#allocation2 + $0x38] sm:$0xf]
        %v393 = vld [vmem:[#allocation2 + $0x3c] sm:$0xf]
        %v394 = vld [vmem:[#allocation2 + $0x40] sm:$0xf]
        %v395 = vld [vmem:[#allocation2 + $0x44] sm:$0xf]
        %v396 = vld [vmem:[#allocation2 + $0x48] sm:$0xf]
        %v397 = vld [vmem:[#allocation2 + $0x4c] sm:$0xf]
        %v398 = vld [vmem:[#allocation2 + $0x50] sm:$0xf]
        %v399 = vld [vmem:[#allocation2 + $0x54] sm:$0xf]
        %v400 = vld [vmem:[#allocation2 + $0x58] sm:$0xf]
        %v401 = vld [vmem:[#allocation2 + $0x5c] sm:$0xf]
        %v402 = vld [vmem:[#allocation2 + $0x60] sm:$0xf]
        %v403 = vld [vmem:[#allocation2 + $0x64] sm:$0xf]
        %v404 = vld [vmem:[#allocation2 + $0x68] sm:$0xf]
        %v405 = vld [vmem:[#allocation2 + $0x6c] sm:$0xf]
        %v406 = vld [vmem:[#allocation2 + $0x70] sm:$0xf]
        %v407 = vld [vmem:[#allocation2 + $0x74] sm:$0xf]
        %v408 = vld [vmem:[#allocation2 + $0x78] sm:$0xf]
        %v409 = vld [vmem:[#allocation2 + $0x7c] sm:$0xf]
        %v410 = vld [vmem:[#allocation2 + $0x80] sm:$0xf]
        %v411 = vld [vmem:[#allocation2 + $0x84] sm:$0xf]
        %v412 = vld [vmem:[#allocation2 + $0x88] sm:$0xf]
        %v413 = vld [vmem:[#allocation2 + $0x8c] sm:$0xf]
        %v414 = vld [vmem:[#allocation2 + $0x90] sm:$0xf]
        %v415 = vld [vmem:[#allocation2 + $0x94] sm:$0xf]
        %v416 = vld [vmem:[#allocation2 + $0x98] sm:$0xf]
        %v417 = vld [vmem:[#allocation2 + $0x9c] sm:$0xf]
        %v418 = vld [vmem:[#allocation2 + $0xa0] sm:$0xf]
        %v419 = vld [vmem:[#allocation2 + $0xa4] sm:$0xf]
        %v420 = vld [vmem:[#allocation2 + $0xa8] sm:$0xf]
        %v421 = vld [vmem:[#allocation2 + $0xac] sm:$0xf]
        %v422 = vld [vmem:[#allocation2 + $0xb0] sm:$0xf]
        %v423 = vld [vmem:[#allocation2 + $0xb4] sm:$0xf]
        %v424 = vld [vmem:[#allocation2 + $0xb8] sm:$0xf]
        %v425 = vld [vmem:[#allocation2 + $0xbc] sm:$0xf]
        %v426 = vld [vmem:[#allocation2 + $0xc0] sm:$0xf]
        %v427 = vld [vmem:[#allocation2 + $0xc4] sm:$0xf]
        %v428 = vld [vmem:[#allocation2 + $0xc8] sm:$0xf]
        %v429 = vld [vmem:[#allocation2 + $0xcc] sm:$0xf]
        %v430 = vld [vmem:[#allocation2 + $0xd0] sm:$0xf]
        %v431 = vld [vmem:[#allocation2 + $0xd4] sm:$0xf]
        %v432 = vld [vmem:[#allocation2 + $0xd8] sm:$0xf]
        %v433 = vld [vmem:[#allocation2 + $0xdc] sm:$0xf]
        %v434 = vld [vmem:[#allocation2 + $0xe0] sm:$0xf]
        %v435 = vld [vmem:[#allocation2 + $0xe4] sm:$0xf]
        %v436 = vld [vmem:[#allocation2 + $0xe8] sm:$0xf]
        %v437 = vld [vmem:[#allocation2 + $0xec] sm:$0xf]
        %v438 = vld [vmem:[#allocation2 + $0xf0] sm:$0xf]
        %v439 = vld [vmem:[#allocation2 + $0xf4] sm:$0xf]
        %v440 = vld [vmem:[#allocation2 + $0xf8] sm:$0xf]
        %v441 = vld [vmem:[#allocation2 + $0xfc] sm:$0xf]
        %v442 = vld [vmem:[#allocation2 + $0x100] sm:$0xf]
        %v443 = vld [vmem:[#allocation2 + $0x104] sm:$0xf]
        %v444 = vld [vmem:[#allocation2 + $0x108] sm:$0xf]
        %v445 = vld [vmem:[#allocation2 + $0x10c] sm:$0xf]
        %v446 = vld [vmem:[#allocation2 + $0x110] sm:$0xf]
        %v447 = vld [vmem:[#allocation2 + $0x114] sm:$0xf]
        %v448 = vld [vmem:[#allocation2 + $0x118] sm:$0xf]
        %v449 = vld [vmem:[#allocation2 + $0x11c] sm:$0xf]
        %v450 = vld [vmem:[#allocation2 + $0x120] sm:$0xf]
        %v451 = vld [vmem:[#allocation2 + $0x124] sm:$0xf]
        %v452 = vld [vmem:[#allocation2 + $0x128] sm:$0xf]
        %v453 = vld [vmem:[#allocation2 + $0x12c] sm:$0xf]
        %v454 = vld [vmem:[#allocation2 + $0x130] sm:$0xf]
        %v455 = vld [vmem:[#allocation2 + $0x134] sm:$0xf]
        %v456 = vld [vmem:[#allocation2 + $0x138] sm:$0xf]
        %v457 = vld [vmem:[#allocation2 + $0x13c] sm:$0xf]
        %v458 = vld [vmem:[#allocation2 + $0x140] sm:$0xf]
        %v459 = vld [vmem:[#allocation2 + $0x144] sm:$0xf]
        %v460 = vld [vmem:[#allocation2 + $0x148] sm:$0xf]
        %v461 = vld [vmem:[#allocation2 + $0x14c] sm:$0xf]
        %v462 = vld [vmem:[#allocation2 + $0x150] sm:$0xf]
        %v463 = vld [vmem:[#allocation2 + $0x154] sm:$0xf]
        %v464 = vld [vmem:[#allocation2 + $0x158] sm:$0xf]
        %v465 = vld [vmem:[#allocation2 + $0x15c] sm:$0xf]
        %v466 = vld [vmem:[#allocation2 + $0x160] sm:$0xf]
        %v467 = vld [vmem:[#allocation2 + $0x164] sm:$0xf]
        %v468 = vld [vmem:[#allocation2 + $0x168] sm:$0xf]
        %v469 = vld [vmem:[#allocation2 + $0x16c] sm:$0xf]
        %v470 = vld [vmem:[#allocation2 + $0x170] sm:$0xf]
        %v471 = vld [vmem:[#allocation2 + $0x174] sm:$0xf]
        %v472 = vld [vmem:[#allocation2 + $0x178] sm:$0xf]
        %v473 = vld [vmem:[#allocation2 + $0x17c] sm:$0xf]
        %v474 = vld [vmem:[%s2] sm:$0x1]
        %v476 = vlaneseq
        %v477 = vshrl.u32 %v476, 7
        %v478 = vsub.s32 0, %v477
        %v479 = vrot.slane %v474, %v478
        %v577 = vunpack.c.l.b16 %v378
        %v578 = vunpack.c.l.b16 %v379
        %v579 = vunpack.c.l.b16 %v380
        %v580 = vunpack.c.l.b16 %v381
        %v581 = vunpack.c.l.b16 %v382
        %v582 = vunpack.c.l.b16 %v383
        %v583 = vunpack.c.l.b16 %v384
        %v584 = vunpack.c.l.b16 %v385
        %v585 = vunpack.c.l.b16 %v386
        %v586 = vunpack.c.l.b16 %v387
        %v587 = vunpack.c.l.b16 %v388
        %v588 = vunpack.c.l.b16 %v389
        %v589 = vunpack.c.l.b16 %v390
        %v590 = vunpack.c.l.b16 %v391
        %v591 = vunpack.c.l.b16 %v392
        %v592 = vunpack.c.l.b16 %v393
        %v593 = vunpack.c.l.b16 %v394
        %v594 = vunpack.c.l.b16 %v395
        %v595 = vunpack.c.l.b16 %v396
        %v596 = vunpack.c.l.b16 %v397
        %v597 = vunpack.c.l.b16 %v398
        %v598 = vunpack.c.l.b16 %v399
        %v599 = vunpack.c.l.b16 %v400
        %v600 = vunpack.c.l.b16 %v401
        %v601 = vunpack.c.l.b16 %v402
        %v602 = vunpack.c.l.b16 %v403
        %v603 = vunpack.c.l.b16 %v404
        %v604 = vunpack.c.l.b16 %v405
        %v605 = vunpack.c.l.b16 %v406
        %v606 = vunpack.c.l.b16 %v407
        %v607 = vunpack.c.l.b16 %v408
        %v608 = vunpack.c.l.b16 %v409
        %v609 = vunpack.c.l.b16 %v410
        %v610 = vunpack.c.l.b16 %v411
        %v611 = vunpack.c.l.b16 %v412
        %v612 = vunpack.c.l.b16 %v413
        %v613 = vunpack.c.l.b16 %v414
        %v614 = vunpack.c.l.b16 %v415
        %v615 = vunpack.c.l.b16 %v416
        %v616 = vunpack.c.l.b16 %v417
        %v617 = vunpack.c.l.b16 %v418
        %v618 = vunpack.c.l.b16 %v419
        %v619 = vunpack.c.l.b16 %v420
        %v620 = vunpack.c.l.b16 %v421
        %v621 = vunpack.c.l.b16 %v422
        %v622 = vunpack.c.l.b16 %v423
        %v623 = vunpack.c.l.b16 %v424
        %v624 = vunpack.c.l.b16 %v425
        %v625 = vunpack.c.l.b16 %v426
        %v626 = vunpack.c.l.b16 %v427
        %v627 = vunpack.c.l.b16 %v428
        %v628 = vunpack.c.l.b16 %v429
        %v629 = vunpack.c.l.b16 %v430
        %v630 = vunpack.c.l.b16 %v431
        %v631 = vunpack.c.l.b16 %v432
        %v632 = vunpack.c.l.b16 %v433
        %v633 = vunpack.c.l.b16 %v434
        %v634 = vunpack.c.l.b16 %v435
        %v635 = vunpack.c.l.b16 %v436
        %v636 = vunpack.c.l.b16 %v437
        %v637 = vunpack.c.l.b16 %v438
        %v638 = vunpack.c.l.b16 %v439
        %v639 = vunpack.c.l.b16 %v440
        %v640 = vunpack.c.l.b16 %v441
        %v641 = vunpack.c.l.b16 %v442
        %v642 = vunpack.c.l.b16 %v443
        %v643 = vunpack.c.l.b16 %v444
        %v644 = vunpack.c.l.b16 %v445
        %v645 = vunpack.c.l.b16 %v446
        %v646 = vunpack.c.l.b16 %v447
        %v647 = vunpack.c.l.b16 %v448
        %v648 = vunpack.c.l.b16 %v449
        %v649 = vunpack.c.l.b16 %v450
        %v650 = vunpack.c.l.b16 %v451
        %v651 = vunpack.c.l.b16 %v452
        %v652 = vunpack.c.l.b16 %v453
        %v653 = vunpack.c.l.b16 %v454
        %v654 = vunpack.c.l.b16 %v455
        %v655 = vunpack.c.l.b16 %v456
        %v656 = vunpack.c.l.b16 %v457
        %v657 = vunpack.c.l.b16 %v458
        %v658 = vunpack.c.l.b16 %v459
        %v659 = vunpack.c.l.b16 %v460
        %v660 = vunpack.c.l.b16 %v461
        %v661 = vunpack.c.l.b16 %v462
        %v662 = vunpack.c.l.b16 %v463
        %v663 = vunpack.c.l.b16 %v464
        %v664 = vunpack.c.l.b16 %v465
        %v665 = vunpack.c.l.b16 %v466
        %v666 = vunpack.c.l.b16 %v467
        %v667 = vunpack.c.l.b16 %v468
        %v668 = vunpack.c.l.b16 %v469
        %v669 = vunpack.c.l.b16 %v470
        %v670 = vunpack.c.l.b16 %v471
        %v671 = vunpack.c.l.b16 %v472
        %v672 = vunpack.c.l.b16 %v473
        %v673 = vpack.c.b16 %v578, %v577
        %v674 = vpack.c.b16 %v580, %v579
        %v675 = vpack.c.b16 %v582, %v581
        %v676 = vpack.c.b16 %v584, %v583
        %v677 = vpack.c.b16 %v586, %v585
        %v678 = vpack.c.b16 %v588, %v587
        %v679 = vpack.c.b16 %v590, %v589
        %v680 = vpack.c.b16 %v592, %v591
        %v681 = vpack.c.b16 %v594, %v593
        %v682 = vpack.c.b16 %v596, %v595
        %v683 = vpack.c.b16 %v598, %v597
        %v684 = vpack.c.b16 %v600, %v599
        %v685 = vpack.c.b16 %v602, %v601
        %v686 = vpack.c.b16 %v604, %v603
        %v687 = vpack.c.b16 %v606, %v605
        %v688 = vpack.c.b16 %v608, %v607
        %v689 = vpack.c.b16 %v610, %v609
        %v690 = vpack.c.b16 %v612, %v611
        %v691 = vpack.c.b16 %v614, %v613
        %v692 = vpack.c.b16 %v616, %v615
        %v693 = vpack.c.b16 %v618, %v617
        %v694 = vpack.c.b16 %v620, %v619
        %v695 = vpack.c.b16 %v622, %v621
        %v696 = vpack.c.b16 %v624, %v623
        %v697 = vpack.c.b16 %v626, %v625
        %v698 = vpack.c.b16 %v628, %v627
        %v699 = vpack.c.b16 %v630, %v629
        %v700 = vpack.c.b16 %v632, %v631
        %v701 = vpack.c.b16 %v634, %v633
        %v702 = vpack.c.b16 %v636, %v635
        %v703 = vpack.c.b16 %v638, %v637
        %v704 = vpack.c.b16 %v640, %v639
        %v705 = vpack.c.b16 %v642, %v641
        %v706 = vpack.c.b16 %v644, %v643
        %v707 = vpack.c.b16 %v646, %v645
        %v708 = vpack.c.b16 %v648, %v647
        %v709 = vpack.c.b16 %v650, %v649
        %v710 = vpack.c.b16 %v652, %v651
        %v711 = vpack.c.b16 %v654, %v653
        %v712 = vpack.c.b16 %v656, %v655
        %v713 = vpack.c.b16 %v658, %v657
        %v714 = vpack.c.b16 %v660, %v659
        %v715 = vpack.c.b16 %v662, %v661
        %v716 = vpack.c.b16 %v664, %v663
        %v717 = vpack.c.b16 %v666, %v665
        %v718 = vpack.c.b16 %v668, %v667
        %v719 = vpack.c.b16 %v670, %v669
        %v720 = vpack.c.b16 %v672, %v671
        %769 = vmatprep.subr.bf16.mxu0 0
        %770 = vmatpush1.bf16.msra.mxu0 %v673
        %771 = vmatprep.subr.bf16.mxu0 0
        %772 = vmatpush1.bf16.msra.mxu0 %v674
        %773 = vmatprep.subr.bf16.mxu0 0
        %774 = vmatpush1.bf16.msra.mxu0 %v675
        %775 = vmatprep.subr.bf16.mxu0 0
        %776 = vmatpush1.bf16.msra.mxu0 %v676
        %777 = vmatprep.subr.bf16.mxu0 0
        %778 = vmatpush1.bf16.msra.mxu0 %v677
        %779 = vmatprep.subr.bf16.mxu0 0
        %780 = vmatpush1.bf16.msra.mxu0 %v678
        %781 = vmatprep.subr.bf16.mxu0 0
        %782 = vmatpush1.bf16.msra.mxu0 %v679
        %783 = vmatprep.subr.bf16.mxu0 0
        %784 = vmatpush1.bf16.msra.mxu0 %v680
        %785 = vmatprep.subr.bf16.mxu0 0
        %786 = vmatpush1.bf16.msra.mxu0 %v681
        %787 = vmatprep.subr.bf16.mxu0 0
        %788 = vmatpush1.bf16.msra.mxu0 %v682
        %789 = vmatprep.subr.bf16.mxu0 0
        %790 = vmatpush1.bf16.msra.mxu0 %v683
        %791 = vmatprep.subr.bf16.mxu0 0
        %792 = vmatpush1.bf16.msra.mxu0 %v684
        %793 = vmatprep.subr.bf16.mxu0 0
        %794 = vmatpush1.bf16.msra.mxu0 %v685
        %795 = vmatprep.subr.bf16.mxu0 0
        %796 = vmatpush1.bf16.msra.mxu0 %v686
        %797 = vmatprep.subr.bf16.mxu0 0
        %798 = vmatpush1.bf16.msra.mxu0 %v687
        %799 = vmatprep.subr.bf16.mxu0 0
        %800 = vmatpush1.bf16.msra.mxu0 %v688
        %801 = vmatprep.mubr.bf16.mxu0 %v373
        %802 = vmatmul.mubr.bf16.gmra.mrb[0].mxu0 %v372
        %v803 = vpop.f32.mrb[0].mxu0
        %v804 = vadd.f32 %v479, %v803
        %v805 = vpop.f32.mrb[0].mxu0
        %v806 = vpop.f32.mrb[0].mxu0
        %v807 = vadd.f32 %v479, %v806
        %v808 = vpop.f32.mrb[0].mxu0
        %809 = vdwg.mxu0
        %810 = vmatprep.subr.bf16.mxu0 0
        %811 = vmatpush1.bf16.msra.mxu0 %v689
        %812 = vmatprep.subr.bf16.mxu0 0
        %813 = vmatpush1.bf16.msra.mxu0 %v690
        %814 = vmatprep.subr.bf16.mxu0 0
        %815 = vmatpush1.bf16.msra.mxu0 %v691
        %816 = vmatprep.subr.bf16.mxu0 0
        %817 = vmatpush1.bf16.msra.mxu0 %v692
        %818 = vmatprep.subr.bf16.mxu0 0
        %819 = vmatpush1.bf16.msra.mxu0 %v693
        %820 = vmatprep.subr.bf16.mxu0 0
        %821 = vmatpush1.bf16.msra.mxu0 %v694
        %822 = vmatprep.subr.bf16.mxu0 0
        %823 = vmatpush1.bf16.msra.mxu0 %v695
        %824 = vmatprep.subr.bf16.mxu0 0
        %825 = vmatpush1.bf16.msra.mxu0 %v696
        %826 = vmatprep.subr.bf16.mxu0 0
        %827 = vmatpush1.bf16.msra.mxu0 %v697
        %828 = vmatprep.subr.bf16.mxu0 0
        %829 = vmatpush1.bf16.msra.mxu0 %v698
        %830 = vmatprep.subr.bf16.mxu0 0
        %831 = vmatpush1.bf16.msra.mxu0 %v699
        %832 = vmatprep.subr.bf16.mxu0 0
        %833 = vmatpush1.bf16.msra.mxu0 %v700
        %834 = vmatprep.subr.bf16.mxu0 0
        %835 = vmatpush1.bf16.msra.mxu0 %v701
        %836 = vmatprep.subr.bf16.mxu0 0
        %837 = vmatpush1.bf16.msra.mxu0 %v702
        %838 = vmatprep.subr.bf16.mxu0 0
        %839 = vmatpush1.bf16.msra.mxu0 %v703
        %840 = vmatprep.subr.bf16.mxu0 0
        %841 = vmatpush1.bf16.msra.mxu0 %v704
        %842 = vmatprep.mubr.bf16.mxu0 %v375
        %843 = vmatmul.mubr.bf16.gmra.mrb[0].mxu0 %v374
        %v844 = vpop.f32.mrb[0].mxu0
        %v845 = vadd.f32 %v804, %v844
        %v846 = vpop.f32.mrb[0].mxu0
        %v847 = vpop.f32.mrb[0].mxu0
        %v848 = vadd.f32 %v807, %v847
        %v849 = vpop.f32.mrb[0].mxu0
        %850 = vdwg.mxu0
        %851 = vmatprep.subr.bf16.mxu0 0
        %852 = vmatpush1.bf16.msra.mxu0 %v705
        %853 = vmatprep.subr.bf16.mxu0 0
        %854 = vmatpush1.bf16.msra.mxu0 %v706
        %855 = vmatprep.subr.bf16.mxu0 0
        %856 = vmatpush1.bf16.msra.mxu0 %v707
        %857 = vmatprep.subr.bf16.mxu0 0
        %858 = vmatpush1.bf16.msra.mxu0 %v708
        %859 = vmatprep.subr.bf16.mxu0 0
        %860 = vmatpush1.bf16.msra.mxu0 %v709
        %861 = vmatprep.subr.bf16.mxu0 0
        %862 = vmatpush1.bf16.msra.mxu0 %v710
        %863 = vmatprep.subr.bf16.mxu0 0
        %864 = vmatpush1.bf16.msra.mxu0 %v711
        %865 = vmatprep.subr.bf16.mxu0 0
        %866 = vmatpush1.bf16.msra.mxu0 %v712
        %867 = vmatprep.subr.bf16.mxu0 0
        %868 = vmatpush1.bf16.msra.mxu0 %v713
        %869 = vmatprep.subr.bf16.mxu0 0
        %870 = vmatpush1.bf16.msra.mxu0 %v714
        %871 = vmatprep.subr.bf16.mxu0 0
        %872 = vmatpush1.bf16.msra.mxu0 %v715
        %873 = vmatprep.subr.bf16.mxu0 0
        %874 = vmatpush1.bf16.msra.mxu0 %v716
        %875 = vmatprep.subr.bf16.mxu0 0
        %876 = vmatpush1.bf16.msra.mxu0 %v717
        %877 = vmatprep.subr.bf16.mxu0 0
        %878 = vmatpush1.bf16.msra.mxu0 %v718
        %879 = vmatprep.subr.bf16.mxu0 0
        %880 = vmatpush1.bf16.msra.mxu0 %v719
        %881 = vmatprep.subr.bf16.mxu0 0
        %882 = vmatpush1.bf16.msra.mxu0 %v720
        %883 = vmatprep.mubr.bf16.mxu0 %v377
        %884 = vmatmul.mubr.bf16.gmra.mrb[0].mxu0 %v376
        %v885 = vpop.f32.mrb[0].mxu0
        %v886 = vadd.f32 %v845, %v885
        %v887 = vpop.f32.mrb[0].mxu0
        %v888 = vpop.f32.mrb[0].mxu0
        %v889 = vadd.f32 %v848, %v888
        %v890 = vpop.f32.mrb[0].mxu0
        %891 = vdwg.mxu0
        %v892 = vmax.f32 %v886, 0.0
        %v893 = vmax.f32 %v889, 0.0
        %v894 = vpack.c.bf16 %v893, %v892
        %v895 = vld [vmem:[#allocation5] sm:$0xff]
        %v896 = vld [vmem:[#allocation5 + $0x8] sm:$0xff]
        %v897 = vld [vmem:[#allocation5 + $0x10] sm:$0xff]
        %v898 = vld [vmem:[#allocation5 + $0x18] sm:$0xff]
        %v899 = vld [vmem:[#allocation5 + $0x20] sm:$0xff]
        %v900 = vld [vmem:[#allocation5 + $0x28] sm:$0xff]
        %v901 = vld [vmem:[#allocation5 + $0x30] sm:$0xff]
        %v902 = vld [vmem:[#allocation5 + $0x38] sm:$0xff]
        %v903 = vld [vmem:[#allocation5 + $0x40] sm:$0xff]
        %v904 = vld [vmem:[#allocation5 + $0x48] sm:$0xff]
        %v905 = vld [vmem:[#allocation5 + $0x50] sm:$0xff]
        %v906 = vld [vmem:[#allocation5 + $0x58] sm:$0xff]
        %v907 = vld [vmem:[#allocation5 + $0x60] sm:$0xff]
        %v908 = vld [vmem:[#allocation5 + $0x68] sm:$0xff]
        %v909 = vld [vmem:[#allocation5 + $0x70] sm:$0xff]
        %v910 = vld [vmem:[#allocation5 + $0x78] sm:$0xff]
        %v911 = vld [vmem:[%s4] sm:$0x3]
        %v913 = vlaneseq
        %v914 = vshrl.u32 %v913, 7
        %v915 = vsub.s32 0, %v914
        %v916 = vrot.slane %v911, %v915
        %v917 = vlaneseq
        %v918 = vshrl.u32 %v917, 7
        %v919 = vsub.s32 1, %v918
        %v920 = vrot.slane %v911, %v919
        %v939 = vunpack.c.l.b16 %v895
        %v940 = vunpack.c.h.b16 %v895
        %v941 = vunpack.c.l.b16 %v896
        %v942 = vunpack.c.h.b16 %v896
        %v943 = vunpack.c.l.b16 %v897
        %v944 = vunpack.c.h.b16 %v897
        %v945 = vunpack.c.l.b16 %v898
        %v946 = vunpack.c.h.b16 %v898
        %v947 = vunpack.c.l.b16 %v899
        %v948 = vunpack.c.h.b16 %v899
        %v949 = vunpack.c.l.b16 %v900
        %v950 = vunpack.c.h.b16 %v900
        %v951 = vunpack.c.l.b16 %v901
        %v952 = vunpack.c.h.b16 %v901
        %v953 = vunpack.c.l.b16 %v902
        %v954 = vunpack.c.h.b16 %v902
        %v955 = vunpack.c.l.b16 %v903
        %v956 = vunpack.c.h.b16 %v903
        %v957 = vunpack.c.l.b16 %v904
        %v958 = vunpack.c.h.b16 %v904
        %v959 = vunpack.c.l.b16 %v905
        %v960 = vunpack.c.h.b16 %v905
        %v961 = vunpack.c.l.b16 %v906
        %v962 = vunpack.c.h.b16 %v906
        %v963 = vunpack.c.l.b16 %v907
        %v964 = vunpack.c.h.b16 %v907
        %v965 = vunpack.c.l.b16 %v908
        %v966 = vunpack.c.h.b16 %v908
        %v967 = vunpack.c.l.b16 %v909
        %v968 = vunpack.c.h.b16 %v909
        %v969 = vunpack.c.l.b16 %v910
        %v970 = vunpack.c.h.b16 %v910
        %v971 = vpack.c.b16 %v941, %v939
        %v972 = vpack.c.b16 %v942, %v940
        %v973 = vpack.c.b16 %v945, %v943
        %v974 = vpack.c.b16 %v946, %v944
        %v975 = vpack.c.b16 %v949, %v947
        %v976 = vpack.c.b16 %v950, %v948
        %v977 = vpack.c.b16 %v953, %v951
        %v978 = vpack.c.b16 %v954, %v952
        %v979 = vpack.c.b16 %v957, %v955
        %v980 = vpack.c.b16 %v958, %v956
        %v981 = vpack.c.b16 %v961, %v959
        %v982 = vpack.c.b16 %v962, %v960
        %v983 = vpack.c.b16 %v965, %v963
        %v984 = vpack.c.b16 %v966, %v964
        %v985 = vpack.c.b16 %v969, %v967
        %v986 = vpack.c.b16 %v970, %v968
        %1003 = vmatprep.subr.bf16.mxu0 %v972
        %1004 = vmatpush1.bf16.msra.mxu0 %v971
        %1005 = vmatprep.subr.bf16.mxu0 %v974
        %1006 = vmatpush1.bf16.msra.mxu0 %v973
        %1007 = vmatprep.subr.bf16.mxu0 %v976
        %1008 = vmatpush1.bf16.msra.mxu0 %v975
        %1009 = vmatprep.subr.bf16.mxu0 %v978
        %1010 = vmatpush1.bf16.msra.mxu0 %v977
        %1011 = vmatprep.subr.bf16.mxu0 %v980
        %1012 = vmatpush1.bf16.msra.mxu0 %v979
        %1013 = vmatprep.subr.bf16.mxu0 %v982
        %1014 = vmatpush1.bf16.msra.mxu0 %v981
        %1015 = vmatprep.subr.bf16.mxu0 %v984
        %1016 = vmatpush1.bf16.msra.mxu0 %v983
        %1017 = vmatprep.subr.bf16.mxu0 %v986
        %1018 = vmatpush1.bf16.msra.mxu0 %v985
        %1019 = vmatprep.subr.bf16.mxu0 0
        %1020 = vmatpush1.bf16.msra.mxu0 0
        %1021 = vmatprep.subr.bf16.mxu0 0
        %1022 = vmatpush1.bf16.msra.mxu0 0
        %1023 = vmatprep.subr.bf16.mxu0 0
        %1024 = vmatpush1.bf16.msra.mxu0 0
        %1025 = vmatprep.subr.bf16.mxu0 0
        %1026 = vmatpush1.bf16.msra.mxu0 0
        %1027 = vmatprep.subr.bf16.mxu0 0
        %1028 = vmatpush1.bf16.msra.mxu0 0
        %1029 = vmatprep.subr.bf16.mxu0 0
        %1030 = vmatpush1.bf16.msra.mxu0 0
        %1031 = vmatprep.subr.bf16.mxu0 0
        %1032 = vmatpush1.bf16.msra.mxu0 0
        %1033 = vmatprep.subr.bf16.mxu0 0
        %1034 = vmatpush1.bf16.msra.mxu0 0
        %1035 = vmatprep.mubr.bf16.mxu0 0
        %1036 = vmatmul.mubr.bf16.gmra.mrb[0].mxu0 %v894
        %v1037 = vpop.f32.mrb[0].mxu0
        %v1038 = vadd.f32 %v916, %v1037
        %v1039 = vpop.f32.mrb[0].mxu0
        %v1040 = vadd.f32 %v920, %v1039
        %v1041 = vpop.f32.mrb[0].mxu0
        %v1042 = vadd.f32 %v916, %v1041
        %v1043 = vpop.f32.mrb[0].mxu0
        %v1044 = vadd.f32 %v920, %v1043
        %1045 = vdwg.mxu0
        %v1046 = vmax.f32 %v1038, %v1040
        %1047 = vmax.xlane.f32.xlu0 %v1046
        %v1048 = vpop.xlane.xlu0 %1047
        %v1049 = vmax.f32 %v1042, %v1044
        %1050 = vmax.xlane.f32.xlu0 %v1049
        %v1051 = vpop.xlane.xlu0 %1050
        %v1052 = vsub.f32 %v1038, %v1048
        %v1053 = vsub.f32 %v1040, %v1048
        %v1054 = vsub.f32 %v1042, %v1051
        %v1055 = vsub.f32 %v1044, %v1051
        %v1056 = vmul.f32 %v1052, 1.442695
        %v1057 = vpow.pop %v1056
        %v1058 = vmul.f32 %v1053, 1.442695
        %v1059 = vpow.pop %v1058
        %v1060 = vmul.f32 %v1054, 1.442695
        %v1061 = vpow.pop %v1060
        %v1062 = vmul.f32 %v1055, 1.442695
        %v1063 = vpow.pop %v1062
        %v1064 = vadd.f32 %v1057, %v1059
        %1065 = vadd.xlane.f32.xlu0 %v1064
        %v1066 = vpop.xlane.xlu0 %1065
        %v1067 = vadd.f32 %v1061, %v1063
        %1068 = vadd.xlane.f32.xlu0 %v1067
        %v1069 = vpop.xlane.xlu0 %1068
        %v1070 = vlog2.pop %v1066
        %v1071 = vmul.f32 %v1070, 0.6931472
        %v1072 = vlog2.pop %v1069
        %v1073 = vmul.f32 %v1072, 0.6931472
        %v1074 = vsub.f32 %v1052, %v1071
        %v1075 = vsub.f32 %v1053, %v1071
        %v1076 = vsub.f32 %v1054, %v1073
        %v1077 = vsub.f32 %v1055, %v1073
        %1078 = vst [vmem:[%s248] sm:$0xff] %v1074
        %1079 = vst [vmem:[%s248 + $0x8] sm:$0xff] %v1075
        %1080 = vst [vmem:[%s248 + $0x10] sm:$0xff] %v1076
        %1081 = vst [vmem:[%s248 + $0x18] sm:$0xff] %v1077
        %s1082 = sand.u32 %s139, 1
        %s1083 = scalar_lea.sflag [#allocation4], %s1082
        %s1084 = sand.u32 %s139, 1
        %s1085 = smul.addr %s1084, 32
        %s1086 = scalar_lea.vmem [#allocation7], %s1085
        // Predicated region
        $region49: #{cbow_forward.1} parent=39 // pred_check
          %p1087 = pneg %p149
        $region50: #{cbow_forward.1} parent=39 // pred_check_branch
          %1089 = sbr.rel (%p1087) target = $region52
        $region51: #{cbow_forward.1} parent=39 // pred_region
          %s1090 = smul.u32 2, %s21
          %s1092 = ssub.s32 512, 512
          %1093 = vsyncadd %s1083, %s1092
          %s1094 = smul.addr %s1090, 2
          %s1095 = smul.addr %s1094, 128
          %s1096 = scalar_lea.hbm %s5, %s1095
          %s1097 = sshll.u32 %s1086, 4
          %s1098 = int_to_ptr.vmem [resolvable:$true] %s1097
          %1103 = dma.vmem_to_hbm [thread:$0]  %s1098, 512, %s1096, %s1083, 256, 256, 16
        $region52: #{cbow_forward.1} parent=39 // pred_fallthru
          _
      $region40: #{cbow_forward.1} parent=5 // pred_fallthru
        _
      %p1104 = scmp.le.s32.totalorder 2, %s16
      // Predicated region
      $region53: #{cbow_forward.1} parent=5 // pred_check
        %p1105 = pneg %p1104
      $region54: #{cbow_forward.1} parent=5 // pred_check_branch
        %1107 = sbr.rel (%p1105) target = $region56
      $region55: #{cbow_forward.1} parent=5 // pred_region
        %s1108 = ssub.s32 %s16, 2
        // Predicated region
        $region57: #{cbow_forward.1} parent=55 // pred_check
          %p1109 = pneg %p155
        $region58: #{cbow_forward.1} parent=55 // pred_check_branch
          %1111 = sbr.rel (%p1109) target = $region60
        $region59: #{cbow_forward.1} parent=55 // pred_region
          %s1112 = sand.u32 %s140, 1
          %s1113 = scalar_lea.sflag [#allocation4], %s1112
          %s1114 = sand.u32 %s140, 1
          %s1115 = smul.addr %s1114, 32
          %s1116 = scalar_lea.vmem [#allocation7], %s1115
          %1117 = dma.done %s1113, 512
        $region60: #{cbow_forward.1} parent=55 // pred_fallthru
          _
      $region56: #{cbow_forward.1} parent=5 // pred_fallthru
        _
    $region6: #{cbow_forward.1} parent=1 // loop_footer
      %s20 = sadd.s32 1, %s16
    $region7: #{cbow_forward.1} parent=1 // loop_footer_branch
      %15 = sbr.rel target = $region3
    $region8: #{cbow_forward.1} parent=1 // loop_exit
      _
    %1118 = vsyncpa [#allocation3], 1
    %s1119 = scalar_lea.sflag [#allocation3], 1
    %1120 = vsyncpa %s1119, 1
    %1121 = vsyncpa [#allocation6], 1
    %1122 = vsyncpa [#allocation4], 1
    %s1123 = scalar_lea.sflag [#allocation4], 1
    %1124 = vsyncpa %s1123, 1

</llo_original>
